<compile_context>
chip_gen: v7x
topology: tpu7x:2x2x1
jax: 0.10.0
libtpu: 0.0.40
codegen_flags: <defaults>
</compile_context>

<pallas_src>
import functools

import jax
import jax.numpy as jnp
import numpy as np
from jax.experimental import pallas as pl
from jax.experimental.pallas import tpu as pltpu

LAMBDA_COORD = 5.0
LAMBDA_NOOBJ = 0.5
IOU_EPS = 1e-16
LANES = 128


def _cdiv(a, b):
    return -(-a // b)


def _round_up(a, b):
    return _cdiv(a, b) * b


def _yolo_loss_kernel(pred_ref, tgt_ref, out_ref):
    lanes = tgt_ref.shape[2]
    n_cls = pred_ref.shape[0] - 5

    @pl.when(pl.program_id(0) == 0)
    def _init():
        out_ref[...] = jnp.zeros_like(out_ref)

    # Per-channel dense (TB, 128) tiles, upcast to f32 in-kernel.
    px = pred_ref[0].astype(jnp.float32)
    py = pred_ref[1].astype(jnp.float32)
    pw = pred_ref[2].astype(jnp.float32)
    ph = pred_ref[3].astype(jnp.float32)
    pconf = pred_ref[4].astype(jnp.float32)
    tx = tgt_ref[0].astype(jnp.float32)
    ty = tgt_ref[1].astype(jnp.float32)
    tw = tgt_ref[2].astype(jnp.float32)
    th = tgt_ref[3].astype(jnp.float32)
    tconf = tgt_ref[4].astype(jnp.float32)

    obj = (tconf == 1.0).astype(jnp.float32)
    noobj = 1.0 - obj  # zero-padded tail cells land here; count fixed in wrapper

    # ---- IoU -> objectness confidence (every cell) ----
    p_x0 = px - pw * 0.5
    p_x1 = px + pw * 0.5
    p_y0 = py - ph * 0.5
    p_y1 = py + ph * 0.5
    t_x0 = tx - tw * 0.5
    t_x1 = tx + tw * 0.5
    t_y0 = ty - th * 0.5
    t_y1 = ty + th * 0.5
    x0_i = jnp.maximum(p_x0, t_x0)
    y0_i = jnp.maximum(p_y0, t_y0)
    x1_i = jnp.minimum(p_x1, t_x1)
    y1_i = jnp.minimum(p_y1, t_y1)
    inter = jnp.maximum((x1_i - x0_i) * (y1_i - y0_i), 0.0)
    union = (jnp.abs((p_x1 - p_x0) * (p_y1 - p_y0))
             + jnp.abs((t_x1 - t_x0) * (t_y1 - t_y0)) - inter)
    # Exact divide kept (pl.reciprocal(approx=True) would perturb numerics).
    conf = pconf * (inter / (union + IOU_EPS))
    sq_conf = (conf - tconf) ** 2

    # ---- xy MSE ----
    sq_xy = (px - tx) ** 2 + (py - ty) ** 2

    # ---- sqrt-wh MSE (guard non-object lanes so sqrt stays finite) ----
    pw_s = jnp.sqrt(jnp.where(obj > 0.0, pw, 1.0))
    ph_s = jnp.sqrt(jnp.where(obj > 0.0, ph, 1.0))
    tw_s = jnp.sqrt(jnp.where(obj > 0.0, tw, 1.0))
    th_s = jnp.sqrt(jnp.where(obj > 0.0, th, 1.0))
    sq_wh = (pw_s - tw_s) ** 2 + (ph_s - th_s) ** 2

    # ---- class BCE (torch.nn.BCELoss clamps log at -100) ----
    zero_row = jnp.zeros((1, lanes), jnp.float32)
    if n_cls > 0:
        pcls = pred_ref[pl.ds(5, n_cls), :, :].astype(jnp.float32)   # (C, TB, 128)
        tcls = tgt_ref[pl.ds(5, n_cls), :, :].astype(jnp.float32)
        pc_safe = jnp.where(obj[None] > 0.0, pcls, 0.5)
        log_p = jnp.maximum(jnp.log(pc_safe), -100.0)
        log_1mp = jnp.maximum(jnp.log(1.0 - pc_safe), -100.0)
        bce_sum = jnp.sum(-(tcls * log_p + (1.0 - tcls) * log_1mp), axis=0)
        bce_row = jnp.sum(obj * bce_sum, axis=0, keepdims=True)
    else:
        bce_row = zero_row

    parts = jnp.concatenate([
        jnp.sum(obj * sq_xy, axis=0, keepdims=True),
        jnp.sum(obj * sq_wh, axis=0, keepdims=True),
        jnp.sum(obj * sq_conf, axis=0, keepdims=True),
        jnp.sum(noobj * sq_conf, axis=0, keepdims=True),
        bce_row,
        jnp.sum(obj, axis=0, keepdims=True),
        jnp.sum(noobj, axis=0, keepdims=True),
        zero_row,
    ], axis=0)                                                        # (8, 128)
    out_ref[...] += parts


@functools.partial(jax.jit, static_argnames=("tile_rows",))
def yolo_v3_loss(pred, target, *, tile_rows=None):
    """Pallas implementation of YoloV3Loss.forward (returns a scalar f32)."""
    feat = pred.shape[-1]
    num_classes = feat - 5
    n = int(np.prod(pred.shape[:-1]))
    dtype_bytes = pred.dtype.itemsize

    # TODO(synk): the PyTorch module raises IndexError when no cell has an
    # object; doing that here would need a blocking device->host sync, so the
    # loss instead becomes inf/nan (division by n_obj == 0); check on-device.

    nb = _cdiv(n, LANES)

    # Tile-row sizing: maximize per-step HBM traffic while keeping the
    # double-buffered input tiles + f32 compute temporaries inside a VMEM
    # budget that fits v5e / v6e / v7x.
    f32b = 4
    bytes_per_row = (
        2 * 2 * feat * LANES * dtype_bytes        # pred+tgt tiles, double-buffered
        + 8 * num_classes * LANES * f32b          # class-block f32 temporaries
        + 32 * LANES * f32b                       # per-channel f32 temporaries
    )
    vmem_budget = 24 << 20
    if tile_rows is None:
        tb = min(512, max(8, (vmem_budget // bytes_per_row) // 8 * 8))
    else:
        tb = _round_up(max(tile_rows, 8), 8)
    tb = max(8, min(tb, _round_up(nb, 8)))
    n_inner = _cdiv(nb, tb)
    nb_pad = n_inner * tb
    n_pad = nb_pad * LANES

    # Glue: pad along N first (fuses into the transpose copy), then a single
    # channel-major (F, N_pad) copy in the input dtype, viewed as (F, NB, 128).
    pred2 = pred.reshape(n, feat)
    tgt2 = target.reshape(n, feat)
    if n_pad > n:
        pred2 = jnp.pad(pred2, ((0, n_pad - n), (0, 0)))
        tgt2 = jnp.pad(tgt2, ((0, n_pad - n), (0, 0)))
    pred3 = pred2.T.reshape(feat, nb_pad, LANES)
    tgt3 = tgt2.T.reshape(feat, nb_pad, LANES)

    cost = pl.CostEstimate(
        flops=int(n_pad * (60 + 7 * num_classes)),
        transcendentals=int(n_pad * (4 + 2 * num_classes)),
        bytes_accessed=int(2 * feat * n_pad * dtype_bytes + 8 * LANES * 4),
    )
    vmem_limit = int(min(max(tb * bytes_per_row + (8 << 20), 32 << 20), 48 << 20))

    partials = pl.pallas_call(
        _yolo_loss_kernel,
        out_shape=jax.ShapeDtypeStruct((8, LANES), jnp.float32),
        grid=(n_inner,),
        in_specs=[
            pl.BlockSpec((feat, tb, LANES), lambda i: (0, i, 0)),
            pl.BlockSpec((feat, tb, LANES), lambda i: (0, i, 0)),
        ],
        out_specs=pl.BlockSpec((8, LANES), lambda i: (0, 0)),
        compiler_params=pltpu.CompilerParams(
            dimension_semantics=("arbitrary",),
            vmem_limit_bytes=vmem_limit),
        cost_estimate=cost,
    )(pred3, tgt3)

    # Tiny scalar combine on the lane-wise partial sums.
    sums = jnp.sum(partials, axis=1)                                   # (8,)
    s_xy, s_wh = sums[0], sums[1]
    s_cobj, s_cnoobj, s_bce = sums[2], sums[3], sums[4]
    n_obj = sums[5]
    # Zero-padded cells contribute exactly 0 to every weighted sum above but
    # are counted as "no object"; subtract the (static) pad count here.
    n_noobj = sums[6] - float(n_pad - n)

    xy_loss = LAMBDA_COORD * s_xy / (2.0 * n_obj)
    wh_loss = LAMBDA_COORD * s_wh / (2.0 * n_obj)
    obj_loss = s_cobj / n_obj + LAMBDA_NOOBJ * s_cnoobj / n_noobj
    if num_classes > 0:
        cls_loss = s_bce / (n_obj * float(num_classes))
    else:
        cls_loss = 0.0
    return xy_loss + wh_loss + obj_loss + cls_loss


def _reference_loss(pred, target):
    """NumPy reference mirroring the PyTorch module exactly."""
    pred = np.asarray(pred, np.float32)
    target = np.asarray(target, np.float32)
    obj = target[..., 4] == 1
    noobj = ~obj
    po, to = pred[obj], target[obj]

    xy = LAMBDA_COORD * np.mean((po[:, 0:2] - to[:, 0:2]) ** 2)
    wh = LAMBDA_COORD * np.mean((np.sqrt(po[:, 2:4]) - np.sqrt(to[:, 2:4])) ** 2)

    def corners(b):
        x0 = b[..., 0] - b[..., 2] / 2
        x1 = b[..., 0] + b[..., 2] / 2
        y0 = b[..., 1] - b[..., 3] / 2
        y1 = b[..., 1] + b[..., 3] / 2
        return x0, y0, x1, y1

    p0x, p0y, p1x, p1y = corners(pred[..., 0:4])
    t0x, t0y, t1x, t1y = corners(target[..., 0:4])
    x0i = np.maximum(p0x, t0x)
    y0i = np.maximum(p0y, t0y)
    x1i = np.minimum(p1x, t1x)
    y1i = np.minimum(p1y, t1y)
    inter = np.maximum((x1i - x0i) * (y1i - y0i), 0.0)
    union = (np.abs((p1x - p0x) * (p1y - p0y))
             + np.abs((t1x - t0x) * (t1y - t0y)) - inter)
    iou = inter / (union + IOU_EPS)
    conf = pred[..., 4] * iou
    obj_loss = (np.mean((conf[obj] - target[..., 4][obj]) ** 2)
                + LAMBDA_NOOBJ * np.mean((conf[noobj] - target[..., 4][noobj]) ** 2))

    pc, tc = po[:, 5:], to[:, 5:]
    bce = -(tc * np.maximum(np.log(pc), -100.0)
            + (1.0 - tc) * np.maximum(np.log(1.0 - pc), -100.0))
    cls = np.mean(bce)
    return np.float32(xy + wh + obj_loss + cls)


if __name__ == "__main__":
    # Small YOLO-like volume: batch=2, anchors=3, grid=16x16, 5 box attrs + 4 classes.
    B, A, S, C = 2, 3, 16, 4
    F = 5 + C
    key = jax.random.PRNGKey(0)
    k_pxy, k_pwh, k_pc, k_pcls, k_txy, k_twh, k_tconf, k_tcls = jax.random.split(key, 8)

    shape = (B, A, S, S)
    pred_xy = jax.nn.sigmoid(jax.random.normal(k_pxy, shape + (2,)))
    pred_wh = jnp.exp(0.3 * jax.random.normal(k_pwh, shape + (2,)))       # positive (sqrt)
    pred_conf = jax.nn.sigmoid(jax.random.normal(k_pc, shape + (1,)))
    pred_cls = jax.nn.sigmoid(jax.random.normal(k_pcls, shape + (C,)))    # in (0,1) for BCE
    pred = jnp.concatenate([pred_xy, pred_wh, pred_conf, pred_cls], axis=-1)

    tgt_xy = jax.random.uniform(k_txy, shape + (2,))
    tgt_wh = jax.random.uniform(k_twh, shape + (2,), minval=0.2, maxval=1.5)
    tgt_conf = (jax.random.uniform(k_tconf, shape + (1,)) < 0.2).astype(jnp.float32)
    tgt_cls = jax.nn.one_hot(
        jax.random.randint(k_tcls, shape, 0, C), C, dtype=jnp.float32)
    target = jnp.concatenate([tgt_xy, tgt_wh, tgt_conf, tgt_cls], axis=-1)

    ref = _reference_loss(pred, target)

    # Default (auto-sized, single large tile for this small problem).
    loss = jax.block_until_ready(yolo_v3_loss(pred, target))
    np.testing.assert_allclose(np.float32(loss), ref, rtol=1e-4, atol=1e-5)

    # Small explicit tile to exercise the multi-step accumulator path.
    loss_small = jax.block_until_ready(yolo_v3_loss(pred, target, tile_rows=8))
    np.testing.assert_allclose(np.float32(loss_small), ref, rtol=1e-4, atol=1e-5)

    print("KERNEL_OK")
</pallas_src>

<mosaic_0001>
module attributes {stable_mosaic.version = 11 : i64} {
  func.func @_yolo_loss_kernel(%arg0: i32, %arg1: memref<9x16x128xf32, #tpu.memory_space<vmem>>, %arg2: memref<9x16x128xf32, #tpu.memory_space<vmem>>, %arg3: memref<8x128xf32, #tpu.memory_space<vmem>>) attributes {dimension_semantics = [#tpu.dimension_semantics<arbitrary>], iteration_bounds = array<i64: 1>, scalar_prefetch = 0 : i64, scratch_operands = 0 : i64, tpu.core_type = #tpu.core_type<tc>, window_params = [{transform_indices = @transform_0, window_bounds = array<i64: 9, 16, 128>}, {transform_indices = @transform_1, window_bounds = array<i64: 9, 16, 128>}, {pipeline_mode = #tpu.pipeline_mode<synchronous>, transform_indices = @transform_2, window_bounds = array<i64: 8, 128>}]} {
    %c0_i32 = arith.constant 0 : i32
    %0 = arith.cmpi eq, %arg0, %c0_i32 : i32
    %1 = arith.extui %0 : i1 to i32
    %c0_i32_0 = arith.constant 0 : i32
    %2 = arith.cmpi ne, %1, %c0_i32_0 : i32
    scf.if %2 {
      %cst_70 = arith.constant 0.000000e+00 : f32
      %157 = vector.broadcast %cst_70 : f32 to vector<8x128xf32>
      %c0_71 = arith.constant 0 : index
      %c0_72 = arith.constant 0 : index
      %158 = vector.load %arg3[%c0_71, %c0_72] : memref<8x128xf32, #tpu.memory_space<vmem>>, vector<8x128xf32>
      tpu.vector_store %arg3[%c0_71, %c0_72], %157 {strides = array<i32>} : memref<8x128xf32, #tpu.memory_space<vmem>>, vector<8x128xf32>,
    } else {
    }
    %c0 = arith.constant 0 : index
    %c0_1 = arith.constant 0 : index
    %c0_2 = arith.constant 0 : index
    %3 = vector.load %arg1[%c0, %c0_1, %c0_2] : memref<9x16x128xf32, #tpu.memory_space<vmem>>, vector<1x16x128xf32>
    %4 = vector.shape_cast %3 : vector<1x16x128xf32> to vector<16x128xf32>
    %c1 = arith.constant 1 : index
    %c0_3 = arith.constant 0 : index
    %c0_4 = arith.constant 0 : index
    %5 = vector.load %arg1[%c1, %c0_3, %c0_4] : memref<9x16x128xf32, #tpu.memory_space<vmem>>, vector<1x16x128xf32>
    %6 = vector.shape_cast %5 : vector<1x16x128xf32> to vector<16x128xf32>
    %c2 = arith.constant 2 : index
    %c0_5 = arith.constant 0 : index
    %c0_6 = arith.constant 0 : index
    %7 = vector.load %arg1[%c2, %c0_5, %c0_6] : memref<9x16x128xf32, #tpu.memory_space<vmem>>, vector<1x16x128xf32>
    %8 = vector.shape_cast %7 : vector<1x16x128xf32> to vector<16x128xf32>
    %c3 = arith.constant 3 : index
    %c0_7 = arith.constant 0 : index
    %c0_8 = arith.constant 0 : index
    %9 = vector.load %arg1[%c3, %c0_7, %c0_8] : memref<9x16x128xf32, #tpu.memory_space<vmem>>, vector<1x16x128xf32>
    %10 = vector.shape_cast %9 : vector<1x16x128xf32> to vector<16x128xf32>
    %c4 = arith.constant 4 : index
    %c0_9 = arith.constant 0 : index
    %c0_10 = arith.constant 0 : index
    %11 = vector.load %arg1[%c4, %c0_9, %c0_10] : memref<9x16x128xf32, #tpu.memory_space<vmem>>, vector<1x16x128xf32>
    %12 = vector.shape_cast %11 : vector<1x16x128xf32> to vector<16x128xf32>
    %c0_11 = arith.constant 0 : index
    %c0_12 = arith.constant 0 : index
    %c0_13 = arith.constant 0 : index
    %13 = vector.load %arg2[%c0_11, %c0_12, %c0_13] : memref<9x16x128xf32, #tpu.memory_space<vmem>>, vector<1x16x128xf32>
    %14 = vector.shape_cast %13 : vector<1x16x128xf32> to vector<16x128xf32>
    %c1_14 = arith.constant 1 : index
    %c0_15 = arith.constant 0 : index
    %c0_16 = arith.constant 0 : index
    %15 = vector.load %arg2[%c1_14, %c0_15, %c0_16] : memref<9x16x128xf32, #tpu.memory_space<vmem>>, vector<1x16x128xf32>
    %16 = vector.shape_cast %15 : vector<1x16x128xf32> to vector<16x128xf32>
    %c2_17 = arith.constant 2 : index
    %c0_18 = arith.constant 0 : index
    %c0_19 = arith.constant 0 : index
    %17 = vector.load %arg2[%c2_17, %c0_18, %c0_19] : memref<9x16x128xf32, #tpu.memory_space<vmem>>, vector<1x16x128xf32>
    %18 = vector.shape_cast %17 : vector<1x16x128xf32> to vector<16x128xf32>
    %c3_20 = arith.constant 3 : index
    %c0_21 = arith.constant 0 : index
    %c0_22 = arith.constant 0 : index
    %19 = vector.load %arg2[%c3_20, %c0_21, %c0_22] : memref<9x16x128xf32, #tpu.memory_space<vmem>>, vector<1x16x128xf32>
    %20 = vector.shape_cast %19 : vector<1x16x128xf32> to vector<16x128xf32>
    %c4_23 = arith.constant 4 : index
    %c0_24 = arith.constant 0 : index
    %c0_25 = arith.constant 0 : index
    %21 = vector.load %arg2[%c4_23, %c0_24, %c0_25] : memref<9x16x128xf32, #tpu.memory_space<vmem>>, vector<1x16x128xf32>
    %22 = vector.shape_cast %21 : vector<1x16x128xf32> to vector<16x128xf32>
    %cst = arith.constant 1.000000e+00 : f32
    %23 = vector.broadcast %cst : f32 to vector<16x128xf32>
    %24 = arith.cmpf oeq, %22, %23 : vector<16x128xf32>
    %25 = arith.extui %24 : vector<16x128xi1> to vector<16x128xi32>
    %26 = arith.sitofp %25 : vector<16x128xi32> to vector<16x128xf32>
    %cst_26 = arith.constant 1.000000e+00 : f32
    %27 = vector.broadcast %cst_26 : f32 to vector<16x128xf32>
    %28 = arith.subf %27, %26 : vector<16x128xf32>
    %cst_27 = arith.constant 5.000000e-01 : f32
    %29 = vector.broadcast %cst_27 : f32 to vector<16x128xf32>
    %30 = arith.mulf %8, %29 : vector<16x128xf32>
    %31 = arith.subf %4, %30 : vector<16x128xf32>
    %cst_28 = arith.constant 5.000000e-01 : f32
    %32 = vector.broadcast %cst_28 : f32 to vector<16x128xf32>
    %33 = arith.mulf %8, %32 : vector<16x128xf32>
    %34 = arith.addf %4, %33 : vector<16x128xf32>
    %cst_29 = arith.constant 5.000000e-01 : f32
    %35 = vector.broadcast %cst_29 : f32 to vector<16x128xf32>
    %36 = arith.mulf %10, %35 : vector<16x128xf32>
    %37 = arith.subf %6, %36 : vector<16x128xf32>
    %cst_30 = arith.constant 5.000000e-01 : f32
    %38 = vector.broadcast %cst_30 : f32 to vector<16x128xf32>
    %39 = arith.mulf %10, %38 : vector<16x128xf32>
    %40 = arith.addf %6, %39 : vector<16x128xf32>
    %cst_31 = arith.constant 5.000000e-01 : f32
    %41 = vector.broadcast %cst_31 : f32 to vector<16x128xf32>
    %42 = arith.mulf %18, %41 : vector<16x128xf32>
    %43 = arith.subf %14, %42 : vector<16x128xf32>
    %cst_32 = arith.constant 5.000000e-01 : f32
    %44 = vector.broadcast %cst_32 : f32 to vector<16x128xf32>
    %45 = arith.mulf %18, %44 : vector<16x128xf32>
    %46 = arith.addf %14, %45 : vector<16x128xf32>
    %cst_33 = arith.constant 5.000000e-01 : f32
    %47 = vector.broadcast %cst_33 : f32 to vector<16x128xf32>
    %48 = arith.mulf %20, %47 : vector<16x128xf32>
    %49 = arith.subf %16, %48 : vector<16x128xf32>
    %cst_34 = arith.constant 5.000000e-01 : f32
    %50 = vector.broadcast %cst_34 : f32 to vector<16x128xf32>
    %51 = arith.mulf %20, %50 : vector<16x128xf32>
    %52 = arith.addf %16, %51 : vector<16x128xf32>
    %53 = arith.maximumf %31, %43 : vector<16x128xf32>
    %54 = arith.maximumf %37, %49 : vector<16x128xf32>
    %55 = arith.minimumf %34, %46 : vector<16x128xf32>
    %56 = arith.minimumf %40, %52 : vector<16x128xf32>
    %57 = arith.subf %55, %53 : vector<16x128xf32>
    %58 = arith.subf %56, %54 : vector<16x128xf32>
    %59 = arith.mulf %57, %58 : vector<16x128xf32>
    %cst_35 = arith.constant 0.000000e+00 : f32
    %60 = vector.broadcast %cst_35 : f32 to vector<16x128xf32>
    %61 = arith.maximumf %59, %60 : vector<16x128xf32>
    %62 = arith.subf %34, %31 : vector<16x128xf32>
    %63 = arith.subf %40, %37 : vector<16x128xf32>
    %64 = arith.mulf %62, %63 : vector<16x128xf32>
    %65 = math.absf %64 : vector<16x128xf32>
    %66 = arith.subf %46, %43 : vector<16x128xf32>
    %67 = arith.subf %52, %49 : vector<16x128xf32>
    %68 = arith.mulf %66, %67 : vector<16x128xf32>
    %69 = math.absf %68 : vector<16x128xf32>
    %70 = arith.addf %65, %69 : vector<16x128xf32>
    %71 = arith.subf %70, %61 : vector<16x128xf32>
    %cst_36 = arith.constant 1.000000e-16 : f32
    %72 = vector.broadcast %cst_36 : f32 to vector<16x128xf32>
    %73 = arith.addf %71, %72 : vector<16x128xf32>
    %74 = arith.divf %61, %73 : vector<16x128xf32>
    %75 = arith.mulf %12, %74 : vector<16x128xf32>
    %76 = arith.subf %75, %22 : vector<16x128xf32>
    %77 = arith.mulf %76, %76 : vector<16x128xf32>
    %78 = arith.subf %4, %14 : vector<16x128xf32>
    %79 = arith.mulf %78, %78 : vector<16x128xf32>
    %80 = arith.subf %6, %16 : vector<16x128xf32>
    %81 = arith.mulf %80, %80 : vector<16x128xf32>
    %82 = arith.addf %79, %81 : vector<16x128xf32>
    %cst_37 = arith.constant 0.000000e+00 : f32
    %83 = vector.broadcast %cst_37 : f32 to vector<16x128xf32>
    %84 = arith.cmpf ogt, %26, %83 : vector<16x128xf32>
    %cst_38 = arith.constant 1.000000e+00 : f32
    %85 = vector.broadcast %cst_38 : f32 to vector<16x128xf32>
    %86 = arith.select %84, %8, %85 : vector<16x128xi1>, vector<16x128xf32>
    %87 = math.sqrt %86 : vector<16x128xf32>
    %cst_39 = arith.constant 0.000000e+00 : f32
    %88 = vector.broadcast %cst_39 : f32 to vector<16x128xf32>
    %89 = arith.cmpf ogt, %26, %88 : vector<16x128xf32>
    %cst_40 = arith.constant 1.000000e+00 : f32
    %90 = vector.broadcast %cst_40 : f32 to vector<16x128xf32>
    %91 = arith.select %89, %10, %90 : vector<16x128xi1>, vector<16x128xf32>
    %92 = math.sqrt %91 : vector<16x128xf32>
    %cst_41 = arith.constant 0.000000e+00 : f32
    %93 = vector.broadcast %cst_41 : f32 to vector<16x128xf32>
    %94 = arith.cmpf ogt, %26, %93 : vector<16x128xf32>
    %cst_42 = arith.constant 1.000000e+00 : f32
    %95 = vector.broadcast %cst_42 : f32 to vector<16x128xf32>
    %96 = arith.select %94, %18, %95 : vector<16x128xi1>, vector<16x128xf32>
    %97 = math.sqrt %96 : vector<16x128xf32>
    %cst_43 = arith.constant 0.000000e+00 : f32
    %98 = vector.broadcast %cst_43 : f32 to vector<16x128xf32>
    %99 = arith.cmpf ogt, %26, %98 : vector<16x128xf32>
    %cst_44 = arith.constant 1.000000e+00 : f32
    %100 = vector.broadcast %cst_44 : f32 to vector<16x128xf32>
    %101 = arith.select %99, %20, %100 : vector<16x128xi1>, vector<16x128xf32>
    %102 = math.sqrt %101 : vector<16x128xf32>
    %103 = arith.subf %87, %97 : vector<16x128xf32>
    %104 = arith.mulf %103, %103 : vector<16x128xf32>
    %105 = arith.subf %92, %102 : vector<16x128xf32>
    %106 = arith.mulf %105, %105 : vector<16x128xf32>
    %107 = arith.addf %104, %106 : vector<16x128xf32>
    %cst_45 = arith.constant 0.000000e+00 : f32
    %108 = vector.broadcast %cst_45 : f32 to vector<1x128xf32>
    %c5 = arith.constant 5 : index
    %c0_46 = arith.constant 0 : index
    %c0_47 = arith.constant 0 : index
    %109 = vector.load %arg1[%c5, %c0_46, %c0_47] : memref<9x16x128xf32, #tpu.memory_space<vmem>>, vector<4x16x128xf32>
    %c5_48 = arith.constant 5 : index
    %c0_49 = arith.constant 0 : index
    %c0_50 = arith.constant 0 : index
    %110 = vector.load %arg2[%c5_48, %c0_49, %c0_50] : memref<9x16x128xf32, #tpu.memory_space<vmem>>, vector<4x16x128xf32>
    %111 = vector.shape_cast %26 : vector<16x128xf32> to vector<1x16x128xf32>
    %cst_51 = arith.constant 0.000000e+00 : f32
    %112 = vector.broadcast %cst_51 : f32 to vector<1x16x128xf32>
    %113 = arith.cmpf ogt, %111, %112 : vector<1x16x128xf32>
    %cst_52 = arith.constant 5.000000e-01 : f32
    %114 = vector.shape_cast %113 : vector<1x16x128xi1> to vector<1x16x128xi1>
    %115 = vector.broadcast %114 : vector<1x16x128xi1> to vector<4x16x128xi1>
    %116 = vector.broadcast %cst_52 : f32 to vector<4x16x128xf32>
    %117 = arith.select %115, %109, %116 : vector<4x16x128xi1>, vector<4x16x128xf32>
    %118 = math.log %117 : vector<4x16x128xf32>
    %cst_53 = arith.constant -1.000000e+02 : f32
    %119 = vector.broadcast %cst_53 : f32 to vector<4x16x128xf32>
    %120 = arith.maximumf %118, %119 : vector<4x16x128xf32>
    %cst_54 = arith.constant 1.000000e+00 : f32
    %121 = vector.broadcast %cst_54 : f32 to vector<4x16x128xf32>
    %122 = arith.subf %121, %117 : vector<4x16x128xf32>
    %123 = math.log %122 : vector<4x16x128xf32>
    %cst_55 = arith.constant -1.000000e+02 : f32
    %124 = vector.broadcast %cst_55 : f32 to vector<4x16x128xf32>
    %125 = arith.maximumf %123, %124 : vector<4x16x128xf32>
    %126 = arith.mulf %110, %120 : vector<4x16x128xf32>
    %cst_56 = arith.constant 1.000000e+00 : f32
    %127 = vector.broadcast %cst_56 : f32 to vector<4x16x128xf32>
    %128 = arith.subf %127, %110 : vector<4x16x128xf32>
    %129 = arith.mulf %128, %125 : vector<4x16x128xf32>
    %130 = arith.addf %126, %129 : vector<4x16x128xf32>
    %cst_57 = arith.constant 0.000000e+00 : f32
    %131 = vector.broadcast %cst_57 : f32 to vector<4x16x128xf32>
    %132 = arith.subf %131, %130 : vector<4x16x128xf32>
    %cst_58 = arith.constant dense<0.000000e+00> : vector<16x128xf32>
    %133 = vector.multi_reduction <add>, %132, %cst_58 [0] : vector<4x16x128xf32> to vector<16x128xf32>
    %134 = arith.mulf %26, %133 : vector<16x128xf32>
    %cst_59 = arith.constant dense<0.000000e+00> : vector<128xf32>
    %135 = vector.multi_reduction <add>, %134, %cst_59 [0] : vector<16x128xf32> to vector<128xf32>
    %136 = vector.shape_cast %135 : vector<128xf32> to vector<1x128xf32>
    %137 = arith.mulf %26, %82 : vector<16x128xf32>
    %cst_60 = arith.constant dense<0.000000e+00> : vector<128xf32>
    %138 = vector.multi_reduction <add>, %137, %cst_60 [0] : vector<16x128xf32> to vector<128xf32>
    %139 = vector.shape_cast %138 : vector<128xf32> to vector<1x128xf32>
    %140 = arith.mulf %26, %107 : vector<16x128xf32>
    %cst_61 = arith.constant dense<0.000000e+00> : vector<128xf32>
    %141 = vector.multi_reduction <add>, %140, %cst_61 [0] : vector<16x128xf32> to vector<128xf32>
    %142 = vector.shape_cast %141 : vector<128xf32> to vector<1x128xf32>
    %143 = arith.mulf %26, %77 : vector<16x128xf32>
    %cst_62 = arith.constant dense<0.000000e+00> : vector<128xf32>
    %144 = vector.multi_reduction <add>, %143, %cst_62 [0] : vector<16x128xf32> to vector<128xf32>
    %145 = vector.shape_cast %144 : vector<128xf32> to vector<1x128xf32>
    %146 = arith.mulf %28, %77 : vector<16x128xf32>
    %cst_63 = arith.constant dense<0.000000e+00> : vector<128xf32>
    %147 = vector.multi_reduction <add>, %146, %cst_63 [0] : vector<16x128xf32> to vector<128xf32>
    %148 = vector.shape_cast %147 : vector<128xf32> to vector<1x128xf32>
    %cst_64 = arith.constant dense<0.000000e+00> : vector<128xf32>
    %149 = vector.multi_reduction <add>, %26, %cst_64 [0] : vector<16x128xf32> to vector<128xf32>
    %150 = vector.shape_cast %149 : vector<128xf32> to vector<1x128xf32>
    %cst_65 = arith.constant dense<0.000000e+00> : vector<128xf32>
    %151 = vector.multi_reduction <add>, %28, %cst_65 [0] : vector<16x128xf32> to vector<128xf32>
    %152 = vector.shape_cast %151 : vector<128xf32> to vector<1x128xf32>
    %153 = tpu.concatenate %139, %142, %145, %148, %136, %150, %152, %108 in 0 : vector<1x128xf32>, vector<1x128xf32>, vector<1x128xf32>, vector<1x128xf32>, vector<1x128xf32>, vector<1x128xf32>, vector<1x128xf32>, vector<1x128xf32> -> vector<8x128xf32>
    %c0_66 = arith.constant 0 : index
    %c0_67 = arith.constant 0 : index
    %154 = vector.load %arg3[%c0_66, %c0_67] : memref<8x128xf32, #tpu.memory_space<vmem>>, vector<8x128xf32>
    %155 = arith.addf %154, %153 : vector<8x128xf32>
    %c0_68 = arith.constant 0 : index
    %c0_69 = arith.constant 0 : index
    %156 = vector.load %arg3[%c0_68, %c0_69] : memref<8x128xf32, #tpu.memory_space<vmem>>, vector<8x128xf32>
    tpu.vector_store %arg3[%c0_68, %c0_69], %155 {strides = array<i32>} : memref<8x128xf32, #tpu.memory_space<vmem>>, vector<8x128xf32>,
    return
  }
  func.func @transform_0(%arg0: i32) -> (i32, i32, i32) {
    %c0_i32 = arith.constant 0 : i32
    %c0_i32_0 = arith.constant 0 : i32
    %c0_i32_1 = arith.constant 0 : i32
    return %c0_i32, %arg0, %c0_i32_0 : i32, i32, i32
  }
  func.func @transform_1(%arg0: i32) -> (i32, i32, i32) {
    %c0_i32 = arith.constant 0 : i32
    %c0_i32_0 = arith.constant 0 : i32
    %c0_i32_1 = arith.constant 0 : i32
    return %c0_i32, %arg0, %c0_i32_0 : i32, i32, i32
  }
  func.func @transform_2(%arg0: i32) -> (i32, i32) {
    %c0_i32 = arith.constant 0 : i32
    %c0_i32_0 = arith.constant 0 : i32
    %c0_i32_1 = arith.constant 0 : i32
    return %c0_i32, %c0_i32_0 : i32, i32
  }
}

</mosaic_0001>

<llo_original>
// kernel: yolo_v3_loss.1
$region0: #{yolo_v3_loss.1}
  #allocation0 [shape = 'u32[]', space=smem, size = 0x4, offset = 0x4, fixed_abs, tag = 'smem constant byte address 0x4 - core index']
  #allocation1 [shape = 'u32[144,128]{1,0:T(1,128)}', space=vmem, size = 0x12000, scoped, tag = 'internal scratch']
  %s0 = inlined_call_operand.vmem [shape: f32[9,16,128], index: 0, kind: input, shape index: {}]
  %s1 = inlined_call_operand.vmem [shape: f32[9,16,128], index: 1, kind: input, shape index: {}]
  %s2 = inlined_call_operand.vmem [shape: f32[8,128], index: 2, kind: output, shape index: {}]
  %s3 = sld [smem:[#allocation0]]
  $region22: #{yolo_v3_loss.1} parent=0
    _
  %s5 = ssub.s32 1, %s3
  %s6 = scalar_select 0, %s5, %s3
  // Predicated region
  $region2: #{yolo_v3_loss.1} parent=0 // pred_check
    _
  $region3: #{yolo_v3_loss.1} parent=0 // pred_check_branch
    %8 = sbr.rel (0) target = $region5
  $region4: #{yolo_v3_loss.1} parent=0 // pred_region
    _
  $region5: #{yolo_v3_loss.1} parent=0 // pred_fallthru
    _
  // Predicated region
  $region6: #{yolo_v3_loss.1} parent=0 // pred_check
    _
  $region7: #{yolo_v3_loss.1} parent=0 // pred_check_branch
    %10 = sbr.rel (0) target = $region9
  $region8: #{yolo_v3_loss.1} parent=0 // pred_region
    _
  $region9: #{yolo_v3_loss.1} parent=0 // pred_fallthru
    _
  %p11 = scmp.eq.s32.totalorder 0, 0
  // Predicated region
  $region10: #{yolo_v3_loss.1} parent=0 // pred_check
    %p12 = pneg %p11
  $region11: #{yolo_v3_loss.1} parent=0 // pred_check_branch
    %14 = sbr.rel (%p12) target = $region13
  $region12: #{yolo_v3_loss.1} parent=0 // pred_region
    %15 = vst [vmem:[%s2] sm:$0xff] 0.0
  $region13: #{yolo_v3_loss.1} parent=0 // pred_fallthru
    _
  %v16 = vld [vmem:[%s0] sm:$0xff]
  %v17 = vld [vmem:[%s0 + $0x8] sm:$0xff]
  %s18 = scalar_lea.vmem %s0, 16
  %v19 = vld [vmem:[%s18] sm:$0xff]
  %v20 = vld [vmem:[%s18 + $0x8] sm:$0xff]
  %s21 = scalar_lea.vmem %s0, 32
  %v22 = vld [vmem:[%s21] sm:$0xff]
  %v23 = vld [vmem:[%s21 + $0x8] sm:$0xff]
  %s24 = scalar_lea.vmem %s0, 48
  %v25 = vld [vmem:[%s24] sm:$0xff]
  %v26 = vld [vmem:[%s24 + $0x8] sm:$0xff]
  %s27 = scalar_lea.vmem %s0, 64
  %v28 = vld [vmem:[%s27] sm:$0xff]
  %v29 = vld [vmem:[%s27 + $0x8] sm:$0xff]
  %v30 = vld [vmem:[%s1] sm:$0xff]
  %v31 = vld [vmem:[%s1 + $0x8] sm:$0xff]
  %s32 = scalar_lea.vmem %s1, 16
  %v33 = vld [vmem:[%s32] sm:$0xff]
  %v34 = vld [vmem:[%s32 + $0x8] sm:$0xff]
  %s35 = scalar_lea.vmem %s1, 32
  %v36 = vld [vmem:[%s35] sm:$0xff]
  %v37 = vld [vmem:[%s35 + $0x8] sm:$0xff]
  %s38 = scalar_lea.vmem %s1, 48
  %v39 = vld [vmem:[%s38] sm:$0xff]
  %v40 = vld [vmem:[%s38 + $0x8] sm:$0xff]
  %s41 = scalar_lea.vmem %s1, 64
  %v42 = vld [vmem:[%s41] sm:$0xff]
  %v43 = vld [vmem:[%s41 + $0x8] sm:$0xff]
  %vm44 = vcmp.eq.f32.partialorder %v42, 1.0
  %vm45 = vcmp.eq.f32.partialorder %v43, 1.0
  %v46 = vsel %vm44, 1, 0
  %v47 = vsel %vm45, 1, 0
  %v48 = vcvt.s32.f32 %v46
  %v49 = vcvt.s32.f32 %v47
  %v50 = vsub.f32 1.0, %v48
  %v51 = vsub.f32 1.0, %v49
  %v52 = vmul.f32 %v22, 0.5
  %v53 = vmul.f32 %v23, 0.5
  %v54 = vsub.f32 %v16, %v52
  %v55 = vsub.f32 %v17, %v53
  %v56 = vadd.f32 %v16, %v52
  %v57 = vadd.f32 %v17, %v53
  %v58 = vmul.f32 %v25, 0.5
  %v59 = vmul.f32 %v26, 0.5
  %v60 = vsub.f32 %v19, %v58
  %v61 = vsub.f32 %v20, %v59
  %v62 = vadd.f32 %v19, %v58
  %v63 = vadd.f32 %v20, %v59
  %v64 = vmul.f32 %v36, 0.5
  %v65 = vmul.f32 %v37, 0.5
  %v66 = vsub.f32 %v30, %v64
  %v67 = vsub.f32 %v31, %v65
  %v68 = vadd.f32 %v30, %v64
  %v69 = vadd.f32 %v31, %v65
  %v70 = vmul.f32 %v39, 0.5
  %v71 = vmul.f32 %v40, 0.5
  %v72 = vsub.f32 %v33, %v70
  %v73 = vsub.f32 %v34, %v71
  %v74 = vadd.f32 %v33, %v70
  %v75 = vadd.f32 %v34, %v71
  %v76 = vmax.f32 %v54, %v66
  %v77 = vmax.f32 %v55, %v67
  %v78 = vmax.f32 %v60, %v72
  %v79 = vmax.f32 %v61, %v73
  %v80 = vmin.f32 %v56, %v68
  %v81 = vmin.f32 %v57, %v69
  %v82 = vmin.f32 %v62, %v74
  %v83 = vmin.f32 %v63, %v75
  %v84 = vsub.f32 %v80, %v76
  %v85 = vsub.f32 %v81, %v77
  %v86 = vsub.f32 %v82, %v78
  %v87 = vsub.f32 %v83, %v79
  %v88 = vmul.f32 %v84, %v86
  %v89 = vmul.f32 %v85, %v87
  %v90 = vmax.f32 %v88, 0.0
  %v91 = vmax.f32 %v89, 0.0
  %v92 = vsub.f32 %v56, %v54
  %v93 = vsub.f32 %v57, %v55
  %v94 = vsub.f32 %v62, %v60
  %v95 = vsub.f32 %v63, %v61
  %v96 = vmul.f32 %v92, %v94
  %v97 = vmul.f32 %v93, %v95
  %v98 = vand.u32 2147483647, %v96
  %v99 = vand.u32 2147483647, %v97
  %v100 = vsub.f32 %v68, %v66
  %v101 = vsub.f32 %v69, %v67
  %v102 = vsub.f32 %v74, %v72
  %v103 = vsub.f32 %v75, %v73
  %v104 = vmul.f32 %v100, %v102
  %v105 = vmul.f32 %v101, %v103
  %v106 = vand.u32 2147483647, %v104
  %v107 = vand.u32 2147483647, %v105
  %v108 = vadd.f32 %v98, %v106
  %v109 = vadd.f32 %v99, %v107
  %v110 = vsub.f32 %v108, %v90
  %v111 = vsub.f32 %v109, %v91
  %v112 = vadd.f32 %v110, 1e-16
  %v113 = vadd.f32 %v111, 1e-16
  %v114 = vrcp.pop %v112
  %v115 = vmul.f32 %v90, %v114
  %v116 = vrcp.pop %v113
  %v117 = vmul.f32 %v91, %v116
  %v118 = vmul.f32 %v28, %v115
  %v119 = vmul.f32 %v29, %v117
  %v120 = vsub.f32 %v118, %v42
  %v121 = vsub.f32 %v119, %v43
  %v122 = vmul.f32 %v120, %v120
  %v123 = vmul.f32 %v121, %v121
  %v124 = vsub.f32 %v16, %v30
  %v125 = vsub.f32 %v17, %v31
  %v126 = vmul.f32 %v124, %v124
  %v127 = vmul.f32 %v125, %v125
  %v128 = vsub.f32 %v19, %v33
  %v129 = vsub.f32 %v20, %v34
  %v130 = vmul.f32 %v128, %v128
  %v131 = vmul.f32 %v129, %v129
  %v132 = vadd.f32 %v126, %v130
  %v133 = vadd.f32 %v127, %v131
  %vm134 = vcmp.gt.f32.partialorder %v48, 0.0
  %vm135 = vcmp.gt.f32.partialorder %v49, 0.0
  %v136 = vsel %vm134, %v22, 1.0
  %v137 = vsel %vm135, %v23, 1.0
  %v138 = vrsqrt.pop %v136
  %v139 = vmul.f32 %v136, %v138
  %vm140 = vcmp.eq.f32.partialorder %v136, inf
  %v141 = vsel %vm140, %v136, %v139
  %vm142 = vcmp.eq.f32.partialorder %v136, 0.0
  %v143 = vand.u32 %v136, 2147483648
  %v144 = vsel %vm142, %v143, %v141
  %v145 = vrsqrt.pop %v137
  %v146 = vmul.f32 %v137, %v145
  %vm147 = vcmp.eq.f32.partialorder %v137, inf
  %v148 = vsel %vm147, %v137, %v146
  %vm149 = vcmp.eq.f32.partialorder %v137, 0.0
  %v150 = vand.u32 %v137, 2147483648
  %v151 = vsel %vm149, %v150, %v148
  %v152 = vsel %vm134, %v25, 1.0
  %v153 = vsel %vm135, %v26, 1.0
  %v154 = vrsqrt.pop %v152
  %v155 = vmul.f32 %v152, %v154
  %vm156 = vcmp.eq.f32.partialorder %v152, inf
  %v157 = vsel %vm156, %v152, %v155
  %vm158 = vcmp.eq.f32.partialorder %v152, 0.0
  %v159 = vand.u32 %v152, 2147483648
  %v160 = vsel %vm158, %v159, %v157
  %v161 = vrsqrt.pop %v153
  %v162 = vmul.f32 %v153, %v161
  %vm163 = vcmp.eq.f32.partialorder %v153, inf
  %v164 = vsel %vm163, %v153, %v162
  %vm165 = vcmp.eq.f32.partialorder %v153, 0.0
  %v166 = vand.u32 %v153, 2147483648
  %v167 = vsel %vm165, %v166, %v164
  %v168 = vsel %vm134, %v36, 1.0
  %v169 = vsel %vm135, %v37, 1.0
  %v170 = vrsqrt.pop %v168
  %v171 = vmul.f32 %v168, %v170
  %vm172 = vcmp.eq.f32.partialorder %v168, inf
  %v173 = vsel %vm172, %v168, %v171
  %vm174 = vcmp.eq.f32.partialorder %v168, 0.0
  %v175 = vand.u32 %v168, 2147483648
  %v176 = vsel %vm174, %v175, %v173
  %v177 = vrsqrt.pop %v169
  %v178 = vmul.f32 %v169, %v177
  %vm179 = vcmp.eq.f32.partialorder %v169, inf
  %v180 = vsel %vm179, %v169, %v178
  %vm181 = vcmp.eq.f32.partialorder %v169, 0.0
  %v182 = vand.u32 %v169, 2147483648
  %v183 = vsel %vm181, %v182, %v180
  %v184 = vsel %vm134, %v39, 1.0
  %v185 = vsel %vm135, %v40, 1.0
  %v186 = vrsqrt.pop %v184
  %v187 = vmul.f32 %v184, %v186
  %vm188 = vcmp.eq.f32.partialorder %v184, inf
  %v189 = vsel %vm188, %v184, %v187
  %vm190 = vcmp.eq.f32.partialorder %v184, 0.0
  %v191 = vand.u32 %v184, 2147483648
  %v192 = vsel %vm190, %v191, %v189
  %v193 = vrsqrt.pop %v185
  %v194 = vmul.f32 %v185, %v193
  %vm195 = vcmp.eq.f32.partialorder %v185, inf
  %v196 = vsel %vm195, %v185, %v194
  %vm197 = vcmp.eq.f32.partialorder %v185, 0.0
  %v198 = vand.u32 %v185, 2147483648
  %v199 = vsel %vm197, %v198, %v196
  %v200 = vsub.f32 %v144, %v176
  %v201 = vsub.f32 %v151, %v183
  %v202 = vmul.f32 %v200, %v200
  %v203 = vmul.f32 %v201, %v201
  %v204 = vsub.f32 %v160, %v192
  %v205 = vsub.f32 %v167, %v199
  %v206 = vmul.f32 %v204, %v204
  %v207 = vmul.f32 %v205, %v205
  %v208 = vadd.f32 %v202, %v206
  %v209 = vadd.f32 %v203, %v207
  %s210 = scalar_lea.vmem %s0, 80
  %v211 = vld [vmem:[%s210] sm:$0xff]
  %v212 = vld [vmem:[%s210 + $0x8] sm:$0xff]
  %v213 = vld [vmem:[%s210 + $0x10] sm:$0xff]
  %v214 = vld [vmem:[%s210 + $0x18] sm:$0xff]
  %v215 = vld [vmem:[%s210 + $0x20] sm:$0xff]
  %v216 = vld [vmem:[%s210 + $0x28] sm:$0xff]
  %v217 = vld [vmem:[%s210 + $0x30] sm:$0xff]
  %v218 = vld [vmem:[%s210 + $0x38] sm:$0xff]
  %s219 = scalar_lea.vmem %s1, 80
  %v220 = vld [vmem:[%s219] sm:$0xff]
  %v221 = vld [vmem:[%s219 + $0x8] sm:$0xff]
  %v222 = vld [vmem:[%s219 + $0x10] sm:$0xff]
  %v223 = vld [vmem:[%s219 + $0x18] sm:$0xff]
  %v224 = vld [vmem:[%s219 + $0x20] sm:$0xff]
  %v225 = vld [vmem:[%s219 + $0x28] sm:$0xff]
  %v226 = vld [vmem:[%s219 + $0x30] sm:$0xff]
  %v227 = vld [vmem:[%s219 + $0x38] sm:$0xff]
  %v228 = vsel %vm134, 1, 0
  %v229 = vsel %vm135, 1, 0
  %vm230 = vcmp.eq.s32.totalorder %v228, 1
  %vm231 = vcmp.eq.s32.totalorder %v229, 1
  %v232 = vsel %vm230, %v211, 0.5
  %v233 = vsel %vm231, %v212, 0.5
  %v234 = vsel %vm230, %v213, 0.5
  %v235 = vsel %vm231, %v214, 0.5
  %v236 = vsel %vm230, %v215, 0.5
  %v237 = vsel %vm231, %v216, 0.5
  %v238 = vsel %vm230, %v217, 0.5
  %v239 = vsel %vm231, %v218, 0.5
  %v240 = vlog2.pop %v232
  %v241 = vmul.f32 %v240, 0.6931472
  %v242 = vlog2.pop %v233
  %v243 = vmul.f32 %v242, 0.6931472
  %v244 = vlog2.pop %v234
  %v245 = vmul.f32 %v244, 0.6931472
  %v246 = vlog2.pop %v235
  %v247 = vmul.f32 %v246, 0.6931472
  %v248 = vlog2.pop %v236
  %v249 = vmul.f32 %v248, 0.6931472
  %v250 = vlog2.pop %v237
  %v251 = vmul.f32 %v250, 0.6931472
  %v252 = vlog2.pop %v238
  %v253 = vmul.f32 %v252, 0.6931472
  %v254 = vlog2.pop %v239
  %v255 = vmul.f32 %v254, 0.6931472
  %v256 = vmax.f32 %v241, -100.0
  %v257 = vmax.f32 %v243, -100.0
  %v258 = vmax.f32 %v245, -100.0
  %v259 = vmax.f32 %v247, -100.0
  %v260 = vmax.f32 %v249, -100.0
  %v261 = vmax.f32 %v251, -100.0
  %v262 = vmax.f32 %v253, -100.0
  %v263 = vmax.f32 %v255, -100.0
  %v264 = vsub.f32 1.0, %v232
  %v265 = vsub.f32 1.0, %v233
  %v266 = vsub.f32 1.0, %v234
  %v267 = vsub.f32 1.0, %v235
  %v268 = vsub.f32 1.0, %v236
  %v269 = vsub.f32 1.0, %v237
  %v270 = vsub.f32 1.0, %v238
  %v271 = vsub.f32 1.0, %v239
  %v272 = vlog2.pop %v264
  %v273 = vmul.f32 %v272, 0.6931472
  %v274 = vlog2.pop %v265
  %v275 = vmul.f32 %v274, 0.6931472
  %v276 = vlog2.pop %v266
  %v277 = vmul.f32 %v276, 0.6931472
  %v278 = vlog2.pop %v267
  %v279 = vmul.f32 %v278, 0.6931472
  %v280 = vlog2.pop %v268
  %v281 = vmul.f32 %v280, 0.6931472
  %v282 = vlog2.pop %v269
  %v283 = vmul.f32 %v282, 0.6931472
  %v284 = vlog2.pop %v270
  %v285 = vmul.f32 %v284, 0.6931472
  %v286 = vlog2.pop %v271
  %v287 = vmul.f32 %v286, 0.6931472
  %v288 = vmax.f32 %v273, -100.0
  %v289 = vmax.f32 %v275, -100.0
  %v290 = vmax.f32 %v277, -100.0
  %v291 = vmax.f32 %v279, -100.0
  %v292 = vmax.f32 %v281, -100.0
  %v293 = vmax.f32 %v283, -100.0
  %v294 = vmax.f32 %v285, -100.0
  %v295 = vmax.f32 %v287, -100.0
  %v296 = vmul.f32 %v220, %v256
  %v297 = vmul.f32 %v221, %v257
  %v298 = vmul.f32 %v222, %v258
  %v299 = vmul.f32 %v223, %v259
  %v300 = vmul.f32 %v224, %v260
  %v301 = vmul.f32 %v225, %v261
  %v302 = vmul.f32 %v226, %v262
  %v303 = vmul.f32 %v227, %v263
  %v304 = vsub.f32 1.0, %v220
  %v305 = vsub.f32 1.0, %v221
  %v306 = vsub.f32 1.0, %v222
  %v307 = vsub.f32 1.0, %v223
  %v308 = vsub.f32 1.0, %v224
  %v309 = vsub.f32 1.0, %v225
  %v310 = vsub.f32 1.0, %v226
  %v311 = vsub.f32 1.0, %v227
  %v312 = vmul.f32 %v304, %v288
  %v313 = vmul.f32 %v305, %v289
  %v314 = vmul.f32 %v306, %v290
  %v315 = vmul.f32 %v307, %v291
  %v316 = vmul.f32 %v308, %v292
  %v317 = vmul.f32 %v309, %v293
  %v318 = vmul.f32 %v310, %v294
  %v319 = vmul.f32 %v311, %v295
  %v320 = vadd.f32 %v296, %v312
  %v321 = vadd.f32 %v297, %v313
  %v322 = vadd.f32 %v298, %v314
  %v323 = vadd.f32 %v299, %v315
  %v324 = vadd.f32 %v300, %v316
  %v325 = vadd.f32 %v301, %v317
  %v326 = vadd.f32 %v302, %v318
  %v327 = vadd.f32 %v303, %v319
  %v328 = vsub.f32 0.0, %v320
  %v329 = vsub.f32 0.0, %v321
  %v330 = vsub.f32 0.0, %v322
  %v331 = vsub.f32 0.0, %v323
  %v332 = vsub.f32 0.0, %v324
  %v333 = vsub.f32 0.0, %v325
  %v334 = vsub.f32 0.0, %v326
  %v335 = vsub.f32 0.0, %v327
  %v336 = vadd.f32 %v328, %v330
  %v337 = vadd.f32 %v336, %v332
  %v338 = vadd.f32 %v337, %v334
  %v339 = vadd.f32 %v329, %v331
  %v340 = vadd.f32 %v339, %v333
  %v341 = vadd.f32 %v340, %v335
  %v342 = vmul.f32 %v48, %v338
  %v343 = vmul.f32 %v49, %v341
  %v344 = vadd.f32 %v342, %v343
  %v345 = vrot.slane %v344, 4
  %v346 = vadd.f32 %v344, %v345
  %v347 = vrot.slane %v346, 2
  %v348 = vadd.f32 %v346, %v347
  %v349 = vrot.slane %v348, 1
  %v350 = vadd.f32 %v348, %v349
  %v351 = vmul.f32 %v48, %v132
  %v352 = vmul.f32 %v49, %v133
  %v353 = vadd.f32 %v351, %v352
  %v354 = vrot.slane %v353, 4
  %v355 = vadd.f32 %v353, %v354
  %v356 = vrot.slane %v355, 2
  %v357 = vadd.f32 %v355, %v356
  %v358 = vrot.slane %v357, 1
  %v359 = vadd.f32 %v357, %v358
  %v360 = vmul.f32 %v48, %v208
  %v361 = vmul.f32 %v49, %v209
  %v362 = vadd.f32 %v360, %v361
  %v363 = vrot.slane %v362, 4
  %v364 = vadd.f32 %v362, %v363
  %v365 = vrot.slane %v364, 2
  %v366 = vadd.f32 %v364, %v365
  %v367 = vrot.slane %v366, 1
  %v368 = vadd.f32 %v366, %v367
  %v369 = vmul.f32 %v48, %v122
  %v370 = vmul.f32 %v49, %v123
  %v371 = vadd.f32 %v369, %v370
  %v372 = vrot.slane %v371, 4
  %v373 = vadd.f32 %v371, %v372
  %v374 = vrot.slane %v373, 2
  %v375 = vadd.f32 %v373, %v374
  %v376 = vrot.slane %v375, 1
  %v377 = vadd.f32 %v375, %v376
  %v378 = vmul.f32 %v50, %v122
  %v379 = vmul.f32 %v51, %v123
  %v380 = vadd.f32 %v378, %v379
  %v381 = vrot.slane %v380, 4
  %v382 = vadd.f32 %v380, %v381
  %v383 = vrot.slane %v382, 2
  %v384 = vadd.f32 %v382, %v383
  %v385 = vrot.slane %v384, 1
  %v386 = vadd.f32 %v384, %v385
  %v387 = vadd.f32 %v48, %v49
  %v388 = vrot.slane %v387, 4
  %v389 = vadd.f32 %v387, %v388
  %v390 = vrot.slane %v389, 2
  %v391 = vadd.f32 %v389, %v390
  %v392 = vrot.slane %v391, 1
  %v393 = vadd.f32 %v391, %v392
  %v394 = vadd.f32 %v50, %v51
  %v395 = vrot.slane %v394, 4
  %v396 = vadd.f32 %v394, %v395
  %v397 = vrot.slane %v396, 2
  %v398 = vadd.f32 %v396, %v397
  %v399 = vrot.slane %v398, 1
  %v400 = vadd.f32 %v398, %v399
  %vm401 = vcmask 1040384
  %v402 = vsel %vm401, %v359, %v368
  %vm403 = vcmask 1041408
  %v404 = vsel %vm403, %v402, %v377
  %vm405 = vcmask 1042432
  %v406 = vsel %vm405, %v404, %v386
  %vm407 = vcmask 1043456
  %v408 = vsel %vm407, %v406, %v350
  %vm409 = vcmask 1044480
  %v410 = vsel %vm409, %v408, %v393
  %vm411 = vcmask 1045504
  %v412 = vsel %vm411, %v410, %v400
  %vm413 = vcmask 1046528
  %v414 = vsel %vm413, %v412, 0.0
  %v415 = vld [vmem:[%s2] sm:$0xff]
  %v416 = vadd.f32 %v415, %v414
  %417 = vst [vmem:[%s2] sm:$0xff] %v416
  // Predicated region
  $region14: #{yolo_v3_loss.1} parent=0 // pred_check
    _
  $region15: #{yolo_v3_loss.1} parent=0 // pred_check_branch
    %419 = sbr.rel (0) target = $region17
  $region16: #{yolo_v3_loss.1} parent=0 // pred_region
    _
  $region17: #{yolo_v3_loss.1} parent=0 // pred_fallthru
    _
  // Predicated region
  $region18: #{yolo_v3_loss.1} parent=0 // pred_check
    _
  $region19: #{yolo_v3_loss.1} parent=0 // pred_check_branch
    %421 = sbr.rel (0) target = $region21
  $region20: #{yolo_v3_loss.1} parent=0 // pred_region
    _
  $region21: #{yolo_v3_loss.1} parent=0 // pred_fallthru
    _

</llo_original>
